<compile_context>
chip_gen: v6e
topology: v6e:2x2x1
jax: 0.10.0
libtpu: 0.0.40
codegen_flags: <defaults>
</compile_context>

<pallas_src>
import jax
import jax.numpy as jnp
from jax.experimental import pallas as pl
from jax.experimental.pallas import tpu as pltpu

INPUT_SIZE = 2
HIDDEN_SIZE = 10
OUTPUT_SIZE = 1

H_PAD = 128     # hidden width padded to one lane tile (lanes 10..127 carry exact zeros)


def _mlp_kernel(x_ref, w1_ref, b1_ref, w2_ref, b2_ref, w3_ref, b3_ref, o_ref):
    # x_ref: (tb, 2) f32; w1: (2, 128) f32; b1/b2/w3: (1, 128) f32; w2: (128, 128) bf16;
    # b3: (1, 1) f32; o_ref: (tb, 1) f32.
    x = x_ref[...]                                            # (tb, 2) f32

    # fc1 + ReLU on the VPU: K=2 is far too small for the MXU; bias is a broadcast add.
    h1 = x[:, 0:1] * w1_ref[0:1, :] + x[:, 1:2] * w1_ref[1:2, :] + b1_ref[...]
    h1 = jnp.maximum(h1, 0.0)                                 # (tb, 128) f32

    # fc2 + ReLU: the one dot worth the MXU; bf16 operands, f32 accumulation & elementwise.
    h2 = jnp.dot(h1.astype(jnp.bfloat16), w2_ref[...],
                 preferred_element_type=jnp.float32) + b2_ref[...]
    h2 = jnp.maximum(h2, 0.0)                                 # (tb, 128) f32

    # fc3 (single output unit): VPU multiply + XLU lane reduction -> narrow (tb, 1) store.
    logit = jnp.sum(h2 * w3_ref[...], axis=-1, keepdims=True) + b3_ref[...]
    o_ref[...] = logit.astype(o_ref.dtype)                    # (tb, 1)


def circle_model_forward(x, params, *, tb=8192):
    """x: (N, INPUT_SIZE). params: padded weights from init_params. Returns (N, 1) f32."""
    n = x.shape[0]
    n8 = max(8, pl.cdiv(n, 8) * 8)                 # batch rounded to the f32 sublane tile
    tb = max(8, (min(tb, n8) // 8) * 8)
    # v7x megacore: ("parallel",) only engages the 2nd TensorCore with >= 2 grid steps,
    # so split batches that would otherwise collapse to a single tile.
    if n8 > 8 and pl.cdiv(n8, tb) < 2:
        tb = pl.cdiv(pl.cdiv(n8, 2), 8) * 8
    n_pad = pl.cdiv(n8, tb) * tb

    x32 = x.astype(jnp.float32)
    if n_pad != n:
        x32 = jnp.pad(x32, ((0, n_pad - n), (0, 0)))   # zero rows only; sliced off below

    out = pl.pallas_call(
        _mlp_kernel,
        out_shape=jax.ShapeDtypeStruct((n_pad, OUTPUT_SIZE), jnp.float32),
        grid=(n_pad // tb,),
        in_specs=[
            pl.BlockSpec((tb, INPUT_SIZE), lambda i: (i, 0)),     # x: streamed over batch
            pl.BlockSpec((INPUT_SIZE, H_PAD), lambda i: (0, 0)),  # w1  (VMEM-resident)
            pl.BlockSpec((1, H_PAD), lambda i: (0, 0)),           # b1
            pl.BlockSpec((H_PAD, H_PAD), lambda i: (0, 0)),       # w2  (bf16)
            pl.BlockSpec((1, H_PAD), lambda i: (0, 0)),           # b2
            pl.BlockSpec((1, H_PAD), lambda i: (0, 0)),           # w3  (row vector)
            pl.BlockSpec((1, 1), lambda i: (0, 0)),               # b3
        ],
        out_specs=pl.BlockSpec((tb, OUTPUT_SIZE), lambda i: (i, 0)),
        compiler_params=pltpu.CompilerParams(
            dimension_semantics=("parallel",)),                   # megacore split on v7x
    )(x32, params["w1"], params["b1"], params["w2"], params["b2"],
      params["w3"], params["b3"])

    return out[:n]


def init_params(key):
    """Deterministic init mirroring nn.Linear defaults (uniform(+/- 1/sqrt(fan_in))).

    Returns (padded, raw):
      padded: lane-padded kernel operands; w2 in bf16 (MXU), everything else f32.
      raw:    unpadded f32 weights + biases for the pure-JAX reference.
    """
    def linear(key, fan_in, fan_out):
        kw, kb = jax.random.split(key)
        bound = 1.0 / jnp.sqrt(jnp.float32(fan_in))
        w = jax.random.uniform(kw, (fan_in, fan_out), jnp.float32, -bound, bound)
        b = jax.random.uniform(kb, (fan_out,), jnp.float32, -bound, bound)
        return w, b

    k1, k2, k3 = jax.random.split(key, 3)
    w1, b1 = linear(k1, INPUT_SIZE, HIDDEN_SIZE)
    w2, b2 = linear(k2, HIDDEN_SIZE, HIDDEN_SIZE)
    w3, b3 = linear(k3, HIDDEN_SIZE, OUTPUT_SIZE)

    w1p = jnp.zeros((INPUT_SIZE, H_PAD), jnp.float32).at[:, :HIDDEN_SIZE].set(w1)
    b1p = jnp.zeros((1, H_PAD), jnp.float32).at[0, :HIDDEN_SIZE].set(b1)
    w2p = jnp.zeros((H_PAD, H_PAD), jnp.float32).at[:HIDDEN_SIZE, :HIDDEN_SIZE].set(w2)
    w2p = w2p.astype(jnp.bfloat16)                   # MXU-native dtype for the dominant dot
    b2p = jnp.zeros((1, H_PAD), jnp.float32).at[0, :HIDDEN_SIZE].set(b2)
    w3p = jnp.zeros((1, H_PAD), jnp.float32).at[0, :HIDDEN_SIZE].set(w3[:, 0])
    b3p = jnp.reshape(b3, (1, 1)).astype(jnp.float32)

    padded = {"w1": w1p, "b1": b1p, "w2": w2p, "b2": b2p, "w3": w3p, "b3": b3p}
    raw = {"w1": w1, "b1": b1, "w2": w2, "b2": b2, "w3": w3, "b3": b3}
    return padded, raw


def reference_forward(x, raw):
    """Pure-JAX f32 reference (same math as the PyTorch module)."""
    h = jnp.maximum(x @ raw["w1"] + raw["b1"], 0.0)
    h = jnp.maximum(h @ raw["w2"] + raw["b2"], 0.0)
    return h @ raw["w3"] + raw["b3"]


if __name__ == "__main__":
    key = jax.random.PRNGKey(0)
    k_param, k_x1, k_x2 = jax.random.split(key, 3)

    padded_params, raw_params = init_params(k_param)

    # Small canonical check (batch=8, 2 features): single grid step.
    x_small = jax.random.normal(k_x1, (8, INPUT_SIZE), jnp.float32)
    out_small = jax.block_until_ready(circle_model_forward(x_small, padded_params))
    ref_small = reference_forward(x_small, raw_params)
    assert out_small.shape == (8, OUTPUT_SIZE), out_small.shape
    # bf16 operands on the fc2 dot -> relaxed tolerance against the pure-f32 reference.
    assert jnp.allclose(out_small, ref_small, atol=5e-2, rtol=5e-2), (out_small, ref_small)

    # Ragged batch with the default tile: exercises row padding + the >=2-grid-step split.
    x_big = jax.random.normal(k_x2, (1000, INPUT_SIZE), jnp.float32)
    out_big = jax.block_until_ready(circle_model_forward(x_big, padded_params))
    ref_big = reference_forward(x_big, raw_params)
    assert out_big.shape == (1000, OUTPUT_SIZE), out_big.shape
    assert jnp.allclose(out_big, ref_big, atol=5e-2, rtol=5e-2), "big-batch mismatch"

    # Explicit small tile: exercises a longer grid (4 steps) streaming x / out blocks.
    out_big2 = jax.block_until_ready(circle_model_forward(x_big, padded_params, tb=256))
    assert jnp.allclose(out_big2, ref_big, atol=5e-2, rtol=5e-2), "tiled-batch mismatch"

    print("KERNEL_OK")
</pallas_src>

<mosaic_0001>
module attributes {stable_mosaic.version = 11 : i64} {
  func.func @_mlp_kernel(%arg0: i32, %arg1: memref<8x2xf32, #tpu.memory_space<vmem>>, %arg2: memref<2x128xf32, #tpu.memory_space<vmem>>, %arg3: memref<1x128xf32, #tpu.memory_space<vmem>>, %arg4: memref<128x128xbf16, #tpu.memory_space<vmem>>, %arg5: memref<1x128xf32, #tpu.memory_space<vmem>>, %arg6: memref<1x128xf32, #tpu.memory_space<vmem>>, %arg7: memref<1x1xf32, #tpu.memory_space<vmem>>, %arg8: memref<8x1xf32, #tpu.memory_space<vmem>>) attributes {dimension_semantics = [#tpu.dimension_semantics<parallel>], iteration_bounds = array<i64: 1>, scalar_prefetch = 0 : i64, scratch_operands = 0 : i64, tpu.core_type = #tpu.core_type<tc>, window_params = [{transform_indices = @transform_0, window_bounds = array<i64: 8, 2>}, {pipeline_mode = #tpu.pipeline_mode<synchronous>, transform_indices = @transform_1, window_bounds = array<i64: 2, 128>}, {pipeline_mode = #tpu.pipeline_mode<synchronous>, transform_indices = @transform_2, window_bounds = array<i64: 1, 128>}, {pipeline_mode = #tpu.pipeline_mode<synchronous>, transform_indices = @transform_3, window_bounds = array<i64: 128, 128>}, {pipeline_mode = #tpu.pipeline_mode<synchronous>, transform_indices = @transform_4, window_bounds = array<i64: 1, 128>}, {pipeline_mode = #tpu.pipeline_mode<synchronous>, transform_indices = @transform_5, window_bounds = array<i64: 1, 128>}, {pipeline_mode = #tpu.pipeline_mode<synchronous>, transform_indices = @transform_6, window_bounds = array<i64: 1, 1>}, {transform_indices = @transform_7, window_bounds = array<i64: 8, 1>}]} {
    %c0 = arith.constant 0 : index
    %c0_0 = arith.constant 0 : index
    %0 = vector.load %arg1[%c0, %c0_0] : memref<8x2xf32, #tpu.memory_space<vmem>>, vector<8x2xf32>
    %1 = vector.extract_strided_slice %0 {offsets = [0, 0], sizes = [8, 1], strides = [1, 1]} : vector<8x2xf32> to vector<8x1xf32>
    %c0_1 = arith.constant 0 : index
    %c0_2 = arith.constant 0 : index
    %2 = vector.load %arg2[%c0_1, %c0_2] : memref<2x128xf32, #tpu.memory_space<vmem>>, vector<1x128xf32>
    %3 = vector.broadcast %1 : vector<8x1xf32> to vector<8x128xf32>
    %4 = vector.broadcast %2 : vector<1x128xf32> to vector<8x128xf32>
    %5 = arith.mulf %3, %4 : vector<8x128xf32>
    %6 = vector.extract_strided_slice %0 {offsets = [0, 1], sizes = [8, 1], strides = [1, 1]} : vector<8x2xf32> to vector<8x1xf32>
    %c1 = arith.constant 1 : index
    %c0_3 = arith.constant 0 : index
    %7 = vector.load %arg2[%c1, %c0_3] : memref<2x128xf32, #tpu.memory_space<vmem>>, vector<1x128xf32>
    %8 = vector.broadcast %6 : vector<8x1xf32> to vector<8x128xf32>
    %9 = vector.broadcast %7 : vector<1x128xf32> to vector<8x128xf32>
    %10 = arith.mulf %8, %9 : vector<8x128xf32>
    %11 = arith.addf %5, %10 : vector<8x128xf32>
    %c0_4 = arith.constant 0 : index
    %c0_5 = arith.constant 0 : index
    %12 = vector.load %arg3[%c0_4, %c0_5] : memref<1x128xf32, #tpu.memory_space<vmem>>, vector<1x128xf32>
    %13 = vector.broadcast %12 : vector<1x128xf32> to vector<8x128xf32>
    %14 = arith.addf %11, %13 : vector<8x128xf32>
    %cst = arith.constant 0.000000e+00 : f32
    %15 = vector.broadcast %cst : f32 to vector<8x128xf32>
    %16 = arith.maximumf %14, %15 : vector<8x128xf32>
    %17 = arith.truncf %16 : vector<8x128xf32> to vector<8x128xbf16>
    %c0_6 = arith.constant 0 : index
    %c0_7 = arith.constant 0 : index
    %18 = vector.load %arg4[%c0_6, %c0_7] : memref<128x128xbf16, #tpu.memory_space<vmem>>, vector<128x128xbf16>
    %cst_8 = arith.constant dense<0.000000e+00> : vector<8x128xf32>
    %19 = tpu.matmul %17, %18, %cst_8 {dimension_numbers = #tpu.dot_dimension_numbers<[1], [0], [0], [1], [0, 0, 1, 1], [], []>} : vector<8x128xbf16>, vector<128x128xbf16>, vector<8x128xf32> -> vector<8x128xf32>
    %c0_9 = arith.constant 0 : index
    %c0_10 = arith.constant 0 : index
    %20 = vector.load %arg5[%c0_9, %c0_10] : memref<1x128xf32, #tpu.memory_space<vmem>>, vector<1x128xf32>
    %21 = vector.broadcast %20 : vector<1x128xf32> to vector<8x128xf32>
    %22 = arith.addf %19, %21 : vector<8x128xf32>
    %cst_11 = arith.constant 0.000000e+00 : f32
    %23 = vector.broadcast %cst_11 : f32 to vector<8x128xf32>
    %24 = arith.maximumf %22, %23 : vector<8x128xf32>
    %c0_12 = arith.constant 0 : index
    %c0_13 = arith.constant 0 : index
    %25 = vector.load %arg6[%c0_12, %c0_13] : memref<1x128xf32, #tpu.memory_space<vmem>>, vector<1x128xf32>
    %26 = vector.broadcast %25 : vector<1x128xf32> to vector<8x128xf32>
    %27 = arith.mulf %24, %26 : vector<8x128xf32>
    %cst_14 = arith.constant dense<0.000000e+00> : vector<8xf32>
    %28 = vector.multi_reduction <add>, %27, %cst_14 [1] : vector<8x128xf32> to vector<8xf32>
    %29 = vector.shape_cast %28 : vector<8xf32> to vector<8x1xf32>
    %c0_15 = arith.constant 0 : index
    %c0_16 = arith.constant 0 : index
    %30 = vector.load %arg7[%c0_15, %c0_16] : memref<1x1xf32, #tpu.memory_space<vmem>>, vector<1x1xf32>
    %31 = vector.broadcast %30 : vector<1x1xf32> to vector<8x1xf32>
    %32 = arith.addf %29, %31 : vector<8x1xf32>
    %c0_17 = arith.constant 0 : index
    %c0_18 = arith.constant 0 : index
    %33 = vector.load %arg8[%c0_17, %c0_18] : memref<8x1xf32, #tpu.memory_space<vmem>>, vector<8x1xf32>
    tpu.vector_store %arg8[%c0_17, %c0_18], %32 {strides = array<i32>} : memref<8x1xf32, #tpu.memory_space<vmem>>, vector<8x1xf32>,
    return
  }
  func.func @transform_0(%arg0: i32) -> (i32, i32) {
    %c0_i32 = arith.constant 0 : i32
    %c0_i32_0 = arith.constant 0 : i32
    return %arg0, %c0_i32 : i32, i32
  }
  func.func @transform_1(%arg0: i32) -> (i32, i32) {
    %c0_i32 = arith.constant 0 : i32
    %c0_i32_0 = arith.constant 0 : i32
    %c0_i32_1 = arith.constant 0 : i32
    return %c0_i32, %c0_i32_0 : i32, i32
  }
  func.func @transform_2(%arg0: i32) -> (i32, i32) {
    %c0_i32 = arith.constant 0 : i32
    %c0_i32_0 = arith.constant 0 : i32
    %c0_i32_1 = arith.constant 0 : i32
    return %c0_i32, %c0_i32_0 : i32, i32
  }
  func.func @transform_3(%arg0: i32) -> (i32, i32) {
    %c0_i32 = arith.constant 0 : i32
    %c0_i32_0 = arith.constant 0 : i32
    %c0_i32_1 = arith.constant 0 : i32
    return %c0_i32, %c0_i32_0 : i32, i32
  }
  func.func @transform_4(%arg0: i32) -> (i32, i32) {
    %c0_i32 = arith.constant 0 : i32
    %c0_i32_0 = arith.constant 0 : i32
    %c0_i32_1 = arith.constant 0 : i32
    return %c0_i32, %c0_i32_0 : i32, i32
  }
  func.func @transform_5(%arg0: i32) -> (i32, i32) {
    %c0_i32 = arith.constant 0 : i32
    %c0_i32_0 = arith.constant 0 : i32
    %c0_i32_1 = arith.constant 0 : i32
    return %c0_i32, %c0_i32_0 : i32, i32
  }
  func.func @transform_6(%arg0: i32) -> (i32, i32) {
    %c0_i32 = arith.constant 0 : i32
    %c0_i32_0 = arith.constant 0 : i32
    %c0_i32_1 = arith.constant 0 : i32
    return %c0_i32, %c0_i32_0 : i32, i32
  }
  func.func @transform_7(%arg0: i32) -> (i32, i32) {
    %c0_i32 = arith.constant 0 : i32
    %c0_i32_0 = arith.constant 0 : i32
    return %arg0, %c0_i32 : i32, i32
  }
}

</mosaic_0001>

<llo_original>
// kernel: tpu_custom_call.1
$region0: #{tpu_custom_call.1}
  #allocation0 [shape = 'u32[]', space=smem, size = 0x4, offset = 0x4, fixed_abs, tag = 'smem constant byte address 0x4 - core index']
  #allocation1 [shape = 'u32[144,128]{1,0:T(1,128)}', space=vmem, size = 0x12000, scoped, tag = 'internal scratch']
  #allocation2 [shape = 'f32[1,1]{1,0:T(1,128)S(1)}', space=vmem, size = 0x200, scoped, tag = 'scoped memory for tpu_custom_call.1']
  %s0 = inlined_call_operand.vmem [shape: f32[8,2], index: 0, kind: input, shape index: {}]
  %s1 = inlined_call_operand.vmem [shape: f32[2,128], index: 1, kind: input, shape index: {}]
  %s2 = inlined_call_operand.vmem [shape: f32[1,128], index: 2, kind: input, shape index: {}]
  %s3 = inlined_call_operand.hbm [shape: bf16[128,128], index: 3, kind: input, shape index: {}]
  %s4 = inlined_call_operand.vmem [shape: f32[1,128], index: 4, kind: input, shape index: {}]
  %s5 = inlined_call_operand.vmem [shape: f32[1,128], index: 5, kind: input, shape index: {}]
  %s6 = inlined_call_operand.<no memory space> [shape: f32[1,1], index: 6, kind: input, shape index: {}]
  %s7 = inlined_call_operand.vmem [shape: f32[8,1], index: 7, kind: output, shape index: {}]
  %s8 = sld [smem:[#allocation0]]
  $region42: #{tpu_custom_call.1} parent=0
    _
  %s10 = ssub.s32 1, %s8
  %s11 = scalar_select 0, %s10, %s8
  %v12 = vstv %s6
  %13 = vst [vmem:[#allocation2] sm:$0x1] %v12
  $region1: #{tpu_custom_call.1} parent=0
    #allocation3 [shape = 'u8[32768]{0}', space=vmem, size = 0x8000, scoped, tag = 'input window, operand 3, single buffered']
    #allocation4 [shape = 's32[1]{0}', space=sflag, size = 0x4, scoped, tag = 'scoped memory for tpu_custom_call.1']
    %14 = vsyncpa [#allocation4], 0
    // Predicated region
    $region2: #{tpu_custom_call.1} parent=1 // pred_check
      _
    $region3: #{tpu_custom_call.1} parent=1 // pred_check_branch
      %16 = sbr.rel (0) target = $region5
    $region4: #{tpu_custom_call.1} parent=1 // pred_region
      _
    $region5: #{tpu_custom_call.1} parent=1 // pred_fallthru
      _
    // Predicated region
    $region6: #{tpu_custom_call.1} parent=1 // pred_check
      _
    $region7: #{tpu_custom_call.1} parent=1 // pred_check_branch
      %18 = sbr.rel (0) target = $region9
    $region8: #{tpu_custom_call.1} parent=1 // pred_region
      _
    $region9: #{tpu_custom_call.1} parent=1 // pred_fallthru
      _
    // Predicated region
    $region10: #{tpu_custom_call.1} parent=1 // pred_check
      _
    $region11: #{tpu_custom_call.1} parent=1 // pred_check_branch
      %20 = sbr.rel (0) target = $region13
    $region12: #{tpu_custom_call.1} parent=1 // pred_region
      _
    $region13: #{tpu_custom_call.1} parent=1 // pred_fallthru
      _
    // Predicated region
    $region14: #{tpu_custom_call.1} parent=1 // pred_check
      _
    $region15: #{tpu_custom_call.1} parent=1 // pred_check_branch
      %22 = sbr.rel (0) target = $region17
    $region16: #{tpu_custom_call.1} parent=1 // pred_region
      %s24 = ssub.s32 1024, 1024
      %25 = vsyncadd [#allocation4], %s24
      %s26 = sshll.u32 [#allocation3], 4
      %s27 = int_to_ptr.vmem [resolvable:$true] %s26
      %32 = dma.hbm_to_vmem [thread:$0]  %s3, 1024, %s27, [#allocation4], 64, 64, 4
    $region17: #{tpu_custom_call.1} parent=1 // pred_fallthru
      _
    // Predicated region
    $region18: #{tpu_custom_call.1} parent=1 // pred_check
      _
    $region19: #{tpu_custom_call.1} parent=1 // pred_check_branch
      %34 = sbr.rel (0) target = $region21
    $region20: #{tpu_custom_call.1} parent=1 // pred_region
      _
    $region21: #{tpu_custom_call.1} parent=1 // pred_fallthru
      _
    // Predicated region
    $region22: #{tpu_custom_call.1} parent=1 // pred_check
      _
    $region23: #{tpu_custom_call.1} parent=1 // pred_check_branch
      %36 = sbr.rel (0) target = $region25
    $region24: #{tpu_custom_call.1} parent=1 // pred_region
      _
    $region25: #{tpu_custom_call.1} parent=1 // pred_fallthru
      _
    // Predicated region
    $region26: #{tpu_custom_call.1} parent=1 // pred_check
      _
    $region27: #{tpu_custom_call.1} parent=1 // pred_check_branch
      %38 = sbr.rel (0) target = $region29
    $region28: #{tpu_custom_call.1} parent=1 // pred_region
      _
    $region29: #{tpu_custom_call.1} parent=1 // pred_fallthru
      _
    // Predicated region
    $region30: #{tpu_custom_call.1} parent=1 // pred_check
      _
    $region31: #{tpu_custom_call.1} parent=1 // pred_check_branch
      %40 = sbr.rel (0) target = $region33
    $region32: #{tpu_custom_call.1} parent=1 // pred_region
      %41 = dma.done [#allocation4], 1024
    $region33: #{tpu_custom_call.1} parent=1 // pred_fallthru
      _
    %v43 = vld [vmem:[%s0] sm:$0xff]
    %v44 = vld [vmem:[%s1] sm:$0x1]
    %46 = vset.pattern.permute.xlu0 0
    %47 = vperm.xlu0 %46, %v43
    %v48 = vpop.permute.xlu0 %47
    %v50 = vlaneseq
    %v51 = vshrl.u32 %v50, 7
    %v52 = vsub.s32 0, %v51
    %v53 = vrot.slane %v44, %v52
    %v54 = vmul.f32 %v48, %v53
    %v55 = vld [vmem:[%s1 + $0x1] sm:$0x1]
    %56 = vset.pattern.permute.xlu0 1
    %57 = vperm.xlu0 %56, %v43
    %v58 = vpop.permute.xlu0 %57
    %v60 = vlaneseq
    %v61 = vshrl.u32 %v60, 7
    %v62 = vsub.s32 0, %v61
    %v63 = vrot.slane %v55, %v62
    %v64 = vmul.f32 %v58, %v63
    %v65 = vadd.f32 %v54, %v64
    %v66 = vld [vmem:[%s2] sm:$0x1]
    %v68 = vlaneseq
    %v69 = vshrl.u32 %v68, 7
    %v70 = vsub.s32 0, %v69
    %v71 = vrot.slane %v66, %v70
    %v73 = vadd.f32 %v65, %v71
    %v74 = vmax.f32 %v73, 0.0
    %v75 = vpack.c.bf16 %v74, %v74
    %v76 = vld [vmem:[#allocation3] sm:$0xf]
    %v77 = vld [vmem:[#allocation3 + $0x4] sm:$0xf]
    %v78 = vld [vmem:[#allocation3 + $0x8] sm:$0xf]
    %v79 = vld [vmem:[#allocation3 + $0xc] sm:$0xf]
    %v80 = vld [vmem:[#allocation3 + $0x10] sm:$0xf]
    %v81 = vld [vmem:[#allocation3 + $0x14] sm:$0xf]
    %v82 = vld [vmem:[#allocation3 + $0x18] sm:$0xf]
    %v83 = vld [vmem:[#allocation3 + $0x1c] sm:$0xf]
    %v84 = vld [vmem:[#allocation3 + $0x20] sm:$0xf]
    %v85 = vld [vmem:[#allocation3 + $0x24] sm:$0xf]
    %v86 = vld [vmem:[#allocation3 + $0x28] sm:$0xf]
    %v87 = vld [vmem:[#allocation3 + $0x2c] sm:$0xf]
    %v88 = vld [vmem:[#allocation3 + $0x30] sm:$0xf]
    %v89 = vld [vmem:[#allocation3 + $0x34] sm:$0xf]
    %v90 = vld [vmem:[#allocation3 + $0x38] sm:$0xf]
    %v91 = vld [vmem:[#allocation3 + $0x3c] sm:$0xf]
    %v92 = vld [vmem:[%s4] sm:$0x1]
    %v94 = vlaneseq
    %v95 = vshrl.u32 %v94, 7
    %v96 = vsub.s32 0, %v95
    %v97 = vrot.slane %v92, %v96
    %v115 = vunpack.c.l.b16 %v76
    %v116 = vunpack.c.l.b16 %v77
    %v117 = vunpack.c.l.b16 %v78
    %v118 = vunpack.c.l.b16 %v79
    %v119 = vunpack.c.l.b16 %v80
    %v120 = vunpack.c.l.b16 %v81
    %v121 = vunpack.c.l.b16 %v82
    %v122 = vunpack.c.l.b16 %v83
    %v123 = vunpack.c.l.b16 %v84
    %v124 = vunpack.c.l.b16 %v85
    %v125 = vunpack.c.l.b16 %v86
    %v126 = vunpack.c.l.b16 %v87
    %v127 = vunpack.c.l.b16 %v88
    %v128 = vunpack.c.l.b16 %v89
    %v129 = vunpack.c.l.b16 %v90
    %v130 = vunpack.c.l.b16 %v91
    %v131 = vpack.c.b16 %v116, %v115
    %v132 = vpack.c.b16 %v118, %v117
    %v133 = vpack.c.b16 %v120, %v119
    %v134 = vpack.c.b16 %v122, %v121
    %v135 = vpack.c.b16 %v124, %v123
    %v136 = vpack.c.b16 %v126, %v125
    %v137 = vpack.c.b16 %v128, %v127
    %v138 = vpack.c.b16 %v130, %v129
    %147 = vmatprep.subr.bf16.mxu0 0
    %148 = vmatpush1.bf16.msra.mxu0 %v138
    %149 = vmatprep.subr.bf16.mxu0 0
    %150 = vmatpush1.bf16.msra.mxu0 %v137
    %151 = vmatprep.subr.bf16.mxu0 0
    %152 = vmatpush1.bf16.msra.mxu0 %v136
    %153 = vmatprep.subr.bf16.mxu0 0
    %154 = vmatpush1.bf16.msra.mxu0 %v135
    %155 = vmatprep.subr.bf16.mxu0 0
    %156 = vmatpush1.bf16.msra.mxu0 %v134
    %157 = vmatprep.subr.bf16.mxu0 0
    %158 = vmatpush1.bf16.msra.mxu0 %v133
    %159 = vmatprep.subr.bf16.mxu0 0
    %160 = vmatpush1.bf16.msra.mxu0 %v132
    %161 = vmatprep.subr.bf16.mxu0 0
    %162 = vmatpush1.bf16.msra.mxu0 %v131
    %163 = vmatprep.subr.bf16.mxu0 0
    %164 = vmatpush2.bf16.msra.mxu0 0
    %165 = vmatprep.subr.bf16.mxu0 0
    %166 = vmatpush2.bf16.msra.mxu0 0
    %167 = vmatprep.subr.bf16.mxu0 0
    %168 = vmatpush2.bf16.msra.mxu0 0
    %169 = vmatprep.subr.bf16.mxu0 0
    %170 = vmatpush2.bf16.msra.mxu0 0
    %171 = vmatprep.subr.bf16.mxu0 0
    %172 = vmatpush2.bf16.msra.mxu0 0
    %173 = vmatprep.subr.bf16.mxu0 0
    %174 = vmatpush2.bf16.msra.mxu0 0
    %175 = vmatprep.subr.bf16.mxu0 0
    %176 = vmatpush2.bf16.msra.mxu0 0
    %177 = vmatprep.subr.bf16.mxu0 0
    %178 = vmatpush2.bf16.msra.mxu0 0
    %179 = vmatprep.mubr.bf16.mxu0 0
    %180 = vmatmul.mubr.bf16.gmra.mxu0 %v75
    %v181 = vpop.f32.mrf.mxu0
    %v182 = vadd.f32 %v97, %v181
    %v183 = vpop.f32.mrf.mxu0
    %v184 = vpop.f32.mrf.mxu0
    %v185 = vpop.f32.mrf.mxu0
    %186 = vdwg.mxu0
    %v187 = vmax.f32 %v182, 0.0
    %v188 = vld [vmem:[%s5] sm:$0x1]
    %v190 = vlaneseq
    %v191 = vshrl.u32 %v190, 7
    %v192 = vsub.s32 0, %v191
    %v193 = vrot.slane %v188, %v192
    %v195 = vmul.f32 %v187, %v193
    %196 = vadd.xlane.f32.xlu0 %v195
    %v197 = vpop.xlane.xlu0 %196
    %v198 = vld [vmem:[#allocation2] sm:$0x1]
    %v200 = vlaneseq
    %v201 = vshrl.u32 %v200, 7
    %v202 = vsub.s32 0, %v201
    %v203 = vrot.slane %v198, %v202
    %v205 = vadd.f32 %v197, %v203
    %vm206 = vcmask 7168
    %207 = vst.msk [vmem:[%s7] sm:$0xff] %vm206, %v205
    // Predicated region
    $region34: #{tpu_custom_call.1} parent=1 // pred_check
      _
    $region35: #{tpu_custom_call.1} parent=1 // pred_check_branch
      %209 = sbr.rel (0) target = $region37
    $region36: #{tpu_custom_call.1} parent=1 // pred_region
      _
    $region37: #{tpu_custom_call.1} parent=1 // pred_fallthru
      _
    // Predicated region
    $region38: #{tpu_custom_call.1} parent=1 // pred_check
      _
    $region39: #{tpu_custom_call.1} parent=1 // pred_check_branch
      %211 = sbr.rel (0) target = $region41
    $region40: #{tpu_custom_call.1} parent=1 // pred_region
      _
    $region41: #{tpu_custom_call.1} parent=1 // pred_fallthru
      _
    %212 = vsyncpa [#allocation4], 1

</llo_original>
